<compile_context>
chip_gen: v7x
topology: tpu7x:2x2x1
jax: 0.10.0
libtpu: 0.0.40
codegen_flags: <defaults>
</compile_context>

<pallas_src>
import functools

import jax
import jax.numpy as jnp
from jax import lax
from jax.experimental import pallas as pl
from jax.experimental.pallas import tpu as pltpu

SMOOTH = 1e-05

LANES = 128
SUBLANES = 8
VREG_ELEMS = SUBLANES * LANES  # 1024 elements per (8,128) vreg tile
CHUNK_ROWS = 64                # 64x128 f32 = 8 vregs per operand per chunk


def _tile_config():
    """(max_row_block, vmem_limit_bytes) per TPU generation."""
    try:
        kind = jax.devices()[0].device_kind.lower()
    except Exception:  # pragma: no cover - defensive
        kind = ""
    if ("v6" in kind) or ("v7" in kind) or ("7x" in kind):
        # v6e/v7x: >=32 MiB scoped VMEM and 1.4-3.2 TB/s HBM -> 8192x128 f32
        # blocks (4 MiB each, ~16 MiB double-buffered for both inputs).
        return 8192, 32 * 1024 * 1024
    # v5e (and older): 16 MiB scoped-VMEM default; 4096-row blocks keep full
    # double buffering of both inputs within budget, and v5e's slower HBM
    # already hides the per-step overhead at this size.
    return 4096, 16 * 1024 * 1024


def _dice_partial_kernel(p_ref, t_ref, o_ref, *, rows, row_block, chunk,
                         inner_steps, needs_mask):
    """Accumulate per-core partial sums of (p*t) and (p+t).

    o_ref block is (1, 2, 8, 128) f32, resident across the inner grid axis:
      [0, 0] holds the running sum of p*t, [0, 1] the running sum of p+t,
    each distributed over an (8,128) vreg tile (final reduce done in wrapper).
    """
    c = pl.program_id(0)   # "parallel" split (TensorCore) index
    i = pl.program_id(1)   # streaming step within this split

    @pl.when(i == 0)
    def _():
        o_ref[...] = jnp.zeros_like(o_ref)

    n_chunks = row_block // chunk
    block_row0 = (c * inner_steps + i) * row_block

    def body(j, carry):
        acc_pt, acc_u = carry
        off = pl.multiple_of(j * chunk, chunk)
        pj = p_ref[pl.ds(off, chunk), :].astype(jnp.float32)
        tj = t_ref[pl.ds(off, chunk), :].astype(jnp.float32)
        if needs_mask:
            rid = (lax.broadcasted_iota(jnp.int32, (chunk, LANES), 0)
                   + (block_row0 + off))
            valid = rid < rows
            pj = jnp.where(valid, pj, 0.0)
            tj = jnp.where(valid, tj, 0.0)
        pt = (pj * tj).reshape(chunk // SUBLANES, SUBLANES, LANES)
        u = (pj + tj).reshape(chunk // SUBLANES, SUBLANES, LANES)
        return acc_pt + jnp.sum(pt, axis=0), acc_u + jnp.sum(u, axis=0)

    zero = jnp.zeros((SUBLANES, LANES), jnp.float32)
    acc_pt, acc_u = lax.fori_loop(0, n_chunks, body, (zero, zero),
                                  unroll=min(4, n_chunks))

    o_ref[0, 0, :, :] += acc_pt
    o_ref[0, 1, :, :] += acc_u


def dice_loss(prediction, target, smooth=SMOOTH):
    """Global soft-dice loss over all elements (matches the PyTorch module)."""
    assert prediction.shape == target.shape
    n = prediction.size

    # Flatten only (metadata reshape, no copy).  Keep the native dtype: the
    # kernel upcasts per-chunk, so bf16 inputs stream half the HBM bytes.
    p = prediction.reshape(-1)
    t = target.reshape(-1)

    # Copy-free whenever n is a multiple of one (8,128) vreg tile.
    n_aligned = ((n + VREG_ELEMS - 1) // VREG_ELEMS) * VREG_ELEMS
    if n_aligned != n:
        # TODO(synk): mask the sub-vreg tail fully in-kernel (element-index
        # iota) so this rare-case pad copy disappears as well.  Zero padding
        # is exact for dice: zeros contribute nothing to any sum.
        p = jnp.pad(p, (0, n_aligned - n))
        t = jnp.pad(t, (0, n_aligned - n))

    rows = n_aligned // LANES          # multiple of 8
    max_row_block, vmem_limit = _tile_config()
    row_block = min(max_row_block, rows)
    chunk = CHUNK_ROWS if row_block % CHUNK_ROWS == 0 else SUBLANES

    blocks = pl.cdiv(rows, row_block)
    # Leading "parallel" axis: lets the two v7x TensorCores each stream half
    # of the row blocks; on single-TC chips it just iterates sequentially.
    splits = 2 if blocks > 1 else 1
    inner_steps = pl.cdiv(blocks, splits)
    needs_mask = splits * inner_steps * row_block > rows

    p2d = p.reshape(rows, LANES)
    t2d = t.reshape(rows, LANES)

    kernel = functools.partial(
        _dice_partial_kernel, rows=rows, row_block=row_block, chunk=chunk,
        inner_steps=inner_steps, needs_mask=needs_mask)

    in_spec = pl.BlockSpec(
        (row_block, LANES),
        lambda c, i, _steps=inner_steps: (c * _steps + i, 0))

    partials = pl.pallas_call(
        kernel,
        out_shape=jax.ShapeDtypeStruct((splits, 2, SUBLANES, LANES),
                                       jnp.float32),
        grid_spec=pltpu.PrefetchScalarGridSpec(
            num_scalar_prefetch=0,
            grid=(splits, inner_steps),
            in_specs=[in_spec, in_spec],
            out_specs=pl.BlockSpec((1, 2, SUBLANES, LANES),
                                   lambda c, i: (c, 0, 0, 0)),
        ),
        compiler_params=pltpu.CompilerParams(
            dimension_semantics=("parallel", "arbitrary"),
            vmem_limit_bytes=vmem_limit),
    )(p2d, t2d)

    # Tiny final combine (at most 2*2*1024 elements) + dice formula in JAX.
    intersection = jnp.sum(partials[:, 0])
    union = jnp.sum(partials[:, 1])
    dice = (2.0 * intersection + smooth) / (union + smooth)
    return 1.0 - dice


def _dice_loss_ref(prediction, target, smooth=SMOOTH):
    p = prediction.astype(jnp.float32)
    t = target.astype(jnp.float32)
    intersection = jnp.sum(p * t)
    union = jnp.sum(p) + jnp.sum(t)
    dice = (2.0 * intersection + smooth) / (union + smooth)
    return 1.0 - dice


if __name__ == "__main__":
    key = jax.random.PRNGKey(0)
    k1, k2 = jax.random.split(key)

    # Segmentation-style predictions (probabilities) and binary targets, NCHW.
    pred = jax.nn.sigmoid(jax.random.normal(k1, (2, 4, 16, 16),
                                            dtype=jnp.float32))
    tgt = (jax.random.uniform(k2, (2, 4, 16, 16)) > 0.5).astype(jnp.float32)

    out = dice_loss(pred, tgt)
    out = jax.block_until_ready(out)

    ref = _dice_loss_ref(pred, tgt)
    assert jnp.allclose(out, ref, rtol=1e-5, atol=1e-6), (out, ref)

    print("KERNEL_OK")
</pallas_src>

<mosaic_0001>
module attributes {stable_mosaic.version = 11 : i64} {
  func.func @_dice_partial_kernel(%arg0: i32, %arg1: i32, %arg2: memref<16x128xf32, #tpu.memory_space<vmem>>, %arg3: memref<16x128xf32, #tpu.memory_space<vmem>>, %arg4: memref<1x2x8x128xf32, #tpu.memory_space<vmem>>) attributes {dimension_semantics = [#tpu.dimension_semantics<parallel>, #tpu.dimension_semantics<arbitrary>], iteration_bounds = array<i64: 1, 1>, scalar_prefetch = 0 : i64, scratch_operands = 0 : i64, tpu.core_type = #tpu.core_type<tc>, window_params = [{transform_indices = @transform_0, window_bounds = array<i64: 16, 128>}, {transform_indices = @transform_1, window_bounds = array<i64: 16, 128>}, {transform_indices = @transform_2, window_bounds = array<i64: 1, 2, 8, 128>}]} {
    %c0_i32 = arith.constant 0 : i32
    %0 = arith.cmpi eq, %arg1, %c0_i32 : i32
    %1 = arith.extui %0 : i1 to i32
    %c0_i32_0 = arith.constant 0 : i32
    %2 = arith.cmpi ne, %1, %c0_i32_0 : i32
    scf.if %2 {
      %cst_25 = arith.constant 0.000000e+00 : f32
      %44 = vector.broadcast %cst_25 : f32 to vector<1x2x8x128xf32>
      %c0_26 = arith.constant 0 : index
      %c0_27 = arith.constant 0 : index
      %c0_28 = arith.constant 0 : index
      %c0_29 = arith.constant 0 : index
      %45 = vector.load %arg4[%c0_26, %c0_27, %c0_28, %c0_29] : memref<1x2x8x128xf32, #tpu.memory_space<vmem>>, vector<1x2x8x128xf32>
      tpu.vector_store %arg4[%c0_26, %c0_27, %c0_28, %c0_29], %44 {strides = array<i32>} : memref<1x2x8x128xf32, #tpu.memory_space<vmem>>, vector<1x2x8x128xf32>,
    } else {
    }
    %cst = arith.constant 0.000000e+00 : f32
    %3 = vector.broadcast %cst : f32 to vector<8x128xf32>
    %c0_i32_1 = arith.constant 0 : i32
    %c8_i32 = arith.constant 8 : i32
    %4 = arith.muli %c0_i32_1, %c8_i32 : i32
    %5 = tpu.assume_multiple %4, 8 : i32
    %6 = arith.index_cast %5 : i32 to index
    %c0 = arith.constant 0 : index
    %7 = vector.load %arg2[%6, %c0] : memref<16x128xf32, #tpu.memory_space<vmem>>, vector<8x128xf32>
    %8 = arith.index_cast %5 : i32 to index
    %c0_2 = arith.constant 0 : index
    %9 = vector.load %arg3[%8, %c0_2] : memref<16x128xf32, #tpu.memory_space<vmem>>, vector<8x128xf32>
    %10 = arith.mulf %7, %9 : vector<8x128xf32>
    %11 = vector.shape_cast %10 : vector<8x128xf32> to vector<1x8x128xf32>
    %12 = arith.addf %7, %9 : vector<8x128xf32>
    %13 = vector.shape_cast %12 : vector<8x128xf32> to vector<1x8x128xf32>
    %cst_3 = arith.constant dense<0.000000e+00> : vector<8x128xf32>
    %14 = vector.multi_reduction <add>, %11, %cst_3 [0] : vector<1x8x128xf32> to vector<8x128xf32>
    %15 = arith.addf %3, %14 : vector<8x128xf32>
    %cst_4 = arith.constant dense<0.000000e+00> : vector<8x128xf32>
    %16 = vector.multi_reduction <add>, %13, %cst_4 [0] : vector<1x8x128xf32> to vector<8x128xf32>
    %17 = arith.addf %3, %16 : vector<8x128xf32>
    %c1_i32 = arith.constant 1 : i32
    %c8_i32_5 = arith.constant 8 : i32
    %18 = arith.muli %c1_i32, %c8_i32_5 : i32
    %19 = tpu.assume_multiple %18, 8 : i32
    %20 = arith.index_cast %19 : i32 to index
    %c0_6 = arith.constant 0 : index
    %21 = vector.load %arg2[%20, %c0_6] : memref<16x128xf32, #tpu.memory_space<vmem>>, vector<8x128xf32>
    %22 = arith.index_cast %19 : i32 to index
    %c0_7 = arith.constant 0 : index
    %23 = vector.load %arg3[%22, %c0_7] : memref<16x128xf32, #tpu.memory_space<vmem>>, vector<8x128xf32>
    %24 = arith.mulf %21, %23 : vector<8x128xf32>
    %25 = vector.shape_cast %24 : vector<8x128xf32> to vector<1x8x128xf32>
    %26 = arith.addf %21, %23 : vector<8x128xf32>
    %27 = vector.shape_cast %26 : vector<8x128xf32> to vector<1x8x128xf32>
    %cst_8 = arith.constant dense<0.000000e+00> : vector<8x128xf32>
    %28 = vector.multi_reduction <add>, %25, %cst_8 [0] : vector<1x8x128xf32> to vector<8x128xf32>
    %29 = arith.addf %15, %28 : vector<8x128xf32>
    %cst_9 = arith.constant dense<0.000000e+00> : vector<8x128xf32>
    %30 = vector.multi_reduction <add>, %27, %cst_9 [0] : vector<1x8x128xf32> to vector<8x128xf32>
    %31 = arith.addf %17, %30 : vector<8x128xf32>
    %c2_i32 = arith.constant 2 : i32
    %c0_10 = arith.constant 0 : index
    %c0_11 = arith.constant 0 : index
    %c0_12 = arith.constant 0 : index
    %c0_13 = arith.constant 0 : index
    %32 = vector.load %arg4[%c0_10, %c0_11, %c0_12, %c0_13] : memref<1x2x8x128xf32, #tpu.memory_space<vmem>>, vector<1x1x8x128xf32>
    %33 = vector.shape_cast %32 : vector<1x1x8x128xf32> to vector<8x128xf32>
    %34 = arith.addf %33, %29 : vector<8x128xf32>
    %c0_14 = arith.constant 0 : index
    %c0_15 = arith.constant 0 : index
    %c0_16 = arith.constant 0 : index
    %c0_17 = arith.constant 0 : index
    %35 = vector.load %arg4[%c0_14, %c0_15, %c0_16, %c0_17] : memref<1x2x8x128xf32, #tpu.memory_space<vmem>>, vector<1x1x8x128xf32>
    %36 = vector.shape_cast %35 : vector<1x1x8x128xf32> to vector<8x128xf32>
    %37 = vector.shape_cast %34 : vector<8x128xf32> to vector<1x1x8x128xf32>
    tpu.vector_store %arg4[%c0_14, %c0_15, %c0_16, %c0_17], %37 {strides = array<i32>} : memref<1x2x8x128xf32, #tpu.memory_space<vmem>>, vector<1x1x8x128xf32>,
    %c0_18 = arith.constant 0 : index
    %c1 = arith.constant 1 : index
    %c0_19 = arith.constant 0 : index
    %c0_20 = arith.constant 0 : index
    %38 = vector.load %arg4[%c0_18, %c1, %c0_19, %c0_20] : memref<1x2x8x128xf32, #tpu.memory_space<vmem>>, vector<1x1x8x128xf32>
    %39 = vector.shape_cast %38 : vector<1x1x8x128xf32> to vector<8x128xf32>
    %40 = arith.addf %39, %31 : vector<8x128xf32>
    %c0_21 = arith.constant 0 : index
    %c1_22 = arith.constant 1 : index
    %c0_23 = arith.constant 0 : index
    %c0_24 = arith.constant 0 : index
    %41 = vector.load %arg4[%c0_21, %c1_22, %c0_23, %c0_24] : memref<1x2x8x128xf32, #tpu.memory_space<vmem>>, vector<1x1x8x128xf32>
    %42 = vector.shape_cast %41 : vector<1x1x8x128xf32> to vector<8x128xf32>
    %43 = vector.shape_cast %40 : vector<8x128xf32> to vector<1x1x8x128xf32>
    tpu.vector_store %arg4[%c0_21, %c1_22, %c0_23, %c0_24], %43 {strides = array<i32>} : memref<1x2x8x128xf32, #tpu.memory_space<vmem>>, vector<1x1x8x128xf32>,
    return
  }
  func.func @transform_0(%arg0: i32, %arg1: i32) -> (i32, i32) {
    %c1_i32 = arith.constant 1 : i32
    %0 = arith.muli %arg0, %c1_i32 : i32
    %1 = arith.addi %0, %arg1 : i32
    %c0_i32 = arith.constant 0 : i32
    %c0_i32_0 = arith.constant 0 : i32
    return %1, %c0_i32 : i32, i32
  }
  func.func @transform_1(%arg0: i32, %arg1: i32) -> (i32, i32) {
    %c1_i32 = arith.constant 1 : i32
    %0 = arith.muli %arg0, %c1_i32 : i32
    %1 = arith.addi %0, %arg1 : i32
    %c0_i32 = arith.constant 0 : i32
    %c0_i32_0 = arith.constant 0 : i32
    return %1, %c0_i32 : i32, i32
  }
  func.func @transform_2(%arg0: i32, %arg1: i32) -> (i32, i32, i32, i32) {
    %c0_i32 = arith.constant 0 : i32
    %c0_i32_0 = arith.constant 0 : i32
    %c0_i32_1 = arith.constant 0 : i32
    %c0_i32_2 = arith.constant 0 : i32
    return %arg0, %c0_i32, %c0_i32_0, %c0_i32_1 : i32, i32, i32, i32
  }
}

</mosaic_0001>

<llo_original>
// kernel: tpu_custom_call.1
$region0: #{tpu_custom_call.1}
  #allocation0 [shape = 'u32[]', space=smem, size = 0x4, offset = 0x4, fixed_abs, tag = 'smem constant byte address 0x4 - core index']
  #allocation1 [shape = 'u32[144,128]{1,0:T(1,128)}', space=vmem, size = 0x12000, scoped, tag = 'internal scratch']
  %s0 = inlined_call_operand.hbm [shape: f32[16,128], index: 0, kind: input, shape index: {}]
  %s1 = inlined_call_operand.hbm [shape: f32[16,128], index: 1, kind: input, shape index: {}]
  %s2 = inlined_call_operand.hbm [shape: f32[1,2,8,128], index: 2, kind: output, shape index: {}]
  %s3 = sld [smem:[#allocation0]]
  $region30: #{tpu_custom_call.1} parent=0
    _
  %s5 = ssub.s32 1, %s3
  %s6 = scalar_select 0, %s5, %s3
  $region1: #{tpu_custom_call.1} parent=0
    #allocation2 [shape = 'u8[8192]{0}', space=vmem, size = 0x2000, scoped, tag = 'input window, operand 0, single buffered']
    #allocation3 [shape = 's32[1]{0}', space=sflag, size = 0x4, scoped, tag = 'scoped memory for tpu_custom_call.1']
    #allocation4 [shape = 's32[1]{0}', space=sflag, size = 0x4, scoped, tag = 'scoped memory for tpu_custom_call.1']
    #allocation5 [shape = 'u8[8192]{0}', space=vmem, size = 0x2000, scoped, tag = 'input window, operand 1, single buffered']
    #allocation6 [shape = 's32[1]{0}', space=sflag, size = 0x4, scoped, tag = 'scoped memory for tpu_custom_call.1']
    #allocation7 [shape = 'u8[8192]{0}', space=vmem, size = 0x2000, scoped, tag = 'output window, operand 0, single buffered']
    %7 = vsyncpa [#allocation3], 0
    %8 = vsyncpa [#allocation6], 0
    %9 = vsyncpa [#allocation4], 0
    // Predicated region
    $region2: #{tpu_custom_call.1} parent=1 // pred_check
      _
    $region3: #{tpu_custom_call.1} parent=1 // pred_check_branch
      %11 = sbr.rel (0) target = $region5
    $region4: #{tpu_custom_call.1} parent=1 // pred_region
      %s12 = sadd.s32 0, 0
      %s13 = smul.u32 2, %s12
      %s15 = ssub.s32 256, 256
      %16 = vsyncadd [#allocation3], %s15
      %s17 = smul.addr %s13, 128
      %s18 = scalar_lea.hbm %s0, %s17
      %s19 = sshll.u32 [#allocation2], 4
      %s20 = int_to_ptr.vmem [resolvable:$true] %s19
      %25 = dma.hbm_to_vmem [thread:$0]  %s18, 256, %s20, [#allocation3], 128, 128, 8
    $region5: #{tpu_custom_call.1} parent=1 // pred_fallthru
      _
    // Predicated region
    $region6: #{tpu_custom_call.1} parent=1 // pred_check
      _
    $region7: #{tpu_custom_call.1} parent=1 // pred_check_branch
      %27 = sbr.rel (0) target = $region9
    $region8: #{tpu_custom_call.1} parent=1 // pred_region
      %s28 = sadd.s32 0, 0
      %s29 = smul.u32 2, %s28
      %s31 = ssub.s32 256, 256
      %32 = vsyncadd [#allocation6], %s31
      %s33 = smul.addr %s29, 128
      %s34 = scalar_lea.hbm %s1, %s33
      %s35 = sshll.u32 [#allocation5], 4
      %s36 = int_to_ptr.vmem [resolvable:$true] %s35
      %41 = dma.hbm_to_vmem [thread:$0]  %s34, 256, %s36, [#allocation6], 128, 128, 8
    $region9: #{tpu_custom_call.1} parent=1 // pred_fallthru
      _
    // Predicated region
    $region10: #{tpu_custom_call.1} parent=1 // pred_check
      _
    $region11: #{tpu_custom_call.1} parent=1 // pred_check_branch
      %43 = sbr.rel (0) target = $region13
    $region12: #{tpu_custom_call.1} parent=1 // pred_region
      %44 = dma.done [#allocation3], 256
    $region13: #{tpu_custom_call.1} parent=1 // pred_fallthru
      _
    // Predicated region
    $region14: #{tpu_custom_call.1} parent=1 // pred_check
      _
    $region15: #{tpu_custom_call.1} parent=1 // pred_check_branch
      %46 = sbr.rel (0) target = $region17
    $region16: #{tpu_custom_call.1} parent=1 // pred_region
      %47 = dma.done [#allocation6], 256
    $region17: #{tpu_custom_call.1} parent=1 // pred_fallthru
      _
    %s48 = sadd.s32 0, 0
    %s49 = smul.u32 2, %s48
    %s50 = sadd.s32 0, 0
    %s51 = smul.u32 2, %s50
    %p52 = scmp.eq.s32.totalorder 0, 0
    // Predicated region
    $region18: #{tpu_custom_call.1} parent=1 // pred_check
      %p53 = pneg %p52
    $region19: #{tpu_custom_call.1} parent=1 // pred_check_branch
      %55 = sbr.rel (%p53) target = $region21
    $region20: #{tpu_custom_call.1} parent=1 // pred_region
      %56 = vst [vmem:[#allocation7] sm:$0xff] 0.0
      %57 = vst [vmem:[#allocation7 + $0x8] sm:$0xff] 0.0
    $region21: #{tpu_custom_call.1} parent=1 // pred_fallthru
      _
    %v58 = vld [vmem:[#allocation2] sm:$0xff]
    %v59 = vld [vmem:[#allocation5] sm:$0xff]
    %v60 = vmul.f32 %v58, %v59
    %v61 = vadd.f32 %v58, %v59
    %v62 = vadd.f32 %v60, 0.0
    %v63 = vadd.f32 %v62, 0.0
    %v64 = vadd.f32 %v61, 0.0
    %v65 = vadd.f32 %v64, 0.0
    %s66 = scalar_lea.vmem [#allocation2], 8
    %v67 = vld [vmem:[%s66] sm:$0xff]
    %s68 = scalar_lea.vmem [#allocation5], 8
    %v69 = vld [vmem:[%s68] sm:$0xff]
    %v70 = vmul.f32 %v67, %v69
    %v71 = vadd.f32 %v67, %v69
    %v72 = vadd.f32 %v70, 0.0
    %v73 = vadd.f32 %v63, %v72
    %v74 = vadd.f32 %v71, 0.0
    %v75 = vadd.f32 %v65, %v74
    %v76 = vld [vmem:[#allocation7] sm:$0xff]
    %v77 = vadd.f32 %v76, %v73
    %78 = vst [vmem:[#allocation7] sm:$0xff] %v77
    %s79 = scalar_lea.vmem [#allocation7], 8
    %v80 = vld [vmem:[%s79] sm:$0xff]
    %v81 = vadd.f32 %v80, %v75
    %82 = vst [vmem:[%s79] sm:$0xff] %v81
    // Predicated region
    $region22: #{tpu_custom_call.1} parent=1 // pred_check
      _
    $region23: #{tpu_custom_call.1} parent=1 // pred_check_branch
      %84 = sbr.rel (0) target = $region25
    $region24: #{tpu_custom_call.1} parent=1 // pred_region
      %s86 = ssub.s32 256, 256
      %87 = vsyncadd [#allocation4], %s86
      %s88 = sshll.u32 [#allocation7], 4
      %s89 = int_to_ptr.vmem [resolvable:$true] %s88
      %94 = dma.vmem_to_hbm [thread:$0]  %s89, 256, %s2, [#allocation4], 128, 128, 8
    $region25: #{tpu_custom_call.1} parent=1 // pred_fallthru
      _
    // Predicated region
    $region26: #{tpu_custom_call.1} parent=1 // pred_check
      _
    $region27: #{tpu_custom_call.1} parent=1 // pred_check_branch
      %96 = sbr.rel (0) target = $region29
    $region28: #{tpu_custom_call.1} parent=1 // pred_region
      %97 = dma.done [#allocation4], 256
    $region29: #{tpu_custom_call.1} parent=1 // pred_fallthru
      _
    %98 = vsyncpa [#allocation3], 1
    %99 = vsyncpa [#allocation6], 1
    %100 = vsyncpa [#allocation4], 1

</llo_original>
